<compile_context>
chip_gen: v5e
topology: v5e:2x2
jax: 0.10.0
libtpu: 0.0.40
codegen_flags: <defaults>
</compile_context>

<pallas_src>
import functools
import math

import jax
import jax.numpy as jnp
from jax import lax
from jax.experimental import pallas as pl
from jax.experimental.pallas import tpu as pltpu

LANE = 128
SUBLANE = 8
MAX_TILE_ROWS = 2048                    # (2048, 128) f32 block = 1 MiB
VMEM_LIMIT_BYTES = 32 * 1024 * 1024     # raise v5e's 16 MiB default; fits v7x's 64 MiB physical
NEG_PAD = -1e30                         # sigmoid / p*t / BCE of this padding are exactly 0


def _round_up(v: int, m: int) -> int:
    return -(-v // m) * m


def _choose_tile_rows(rows: int) -> int:
    """Tile rows: multiple of 8, <= MAX_TILE_ROWS, and split into >= 2 grid tiles when
    the whole input would otherwise fit one block (so both v7x TensorCores get work)."""
    tile = min(MAX_TILE_ROWS, rows)
    if tile == rows and rows >= 2 * SUBLANE:
        tile = _round_up(rows // 2, SUBLANE)
    return tile


def _elementwise(x, t):
    """Per-element p, t, p*t, BCE with shared transcendentals; stable for any |x|."""
    e = jnp.exp(-jnp.abs(x))                             # exp(-|x|) in (0, 1]
    p = jnp.where(x >= 0.0, 1.0, e) / (1.0 + e)          # == sigmoid(x), stable
    sp_pos = jnp.maximum(x, 0.0) + jnp.log(1.0 + e)      # softplus(x)  = -log(1 - p)
    sp_neg = sp_pos - x                                  # softplus(-x) = -log(p)
    # torch.nn.functional.binary_cross_entropy clamps each log term at -100:
    bce = t * jnp.minimum(sp_neg, 100.0) + (1.0 - t) * jnp.minimum(sp_pos, 100.0)
    return p, t, p * t, bce


def _dice_bce_partial_kernel(x_ref, t_ref, out_ref, *, valid_rows_last):
    """out_ref[k, :] = sublane-reduced partials of
    k=0: sigmoid(x), k=1: t, k=2: sigmoid(x)*t, k=3: per-element BCE."""
    x = x_ref[...].astype(jnp.float32)
    t = t_ref[...].astype(jnp.float32)
    p, tt, pt, bce = _elementwise(x, t)

    def store(vals):
        for k, v in enumerate(vals):
            out_ref[k:k + 1, :] = jnp.sum(v, axis=0, keepdims=True)

    tile_rows = x.shape[0]
    if valid_rows_last == tile_rows:
        # Grid divides the row count exactly: zero masking work anywhere.
        store((p, tt, pt, bce))
    else:
        is_last = pl.program_id(0) == pl.num_programs(0) - 1

        @pl.when(jnp.logical_not(is_last))
        def _():
            store((p, tt, pt, bce))

        @pl.when(is_last)
        def _():
            # Only the final grid tile can read Pallas' unspecified block padding;
            # mask those rows out here and nowhere else.
            row = lax.broadcasted_iota(jnp.int32, x.shape, 0)
            m = row < valid_rows_last
            z = jnp.zeros_like(p)
            store((jnp.where(m, p, z), jnp.where(m, tt, z),
                   jnp.where(m, pt, z), jnp.where(m, bce, z)))


@functools.partial(jax.jit, static_argnames=("smooth",))
def dice_bce_loss(x, target, smooth: float = 1.0):
    """Pallas implementation of DiceBCELoss.forward (returns a scalar f32)."""
    n = int(math.prod(x.shape))
    xf = x.reshape(-1)          # keep original dtype: no f32 materialization in HBM
    tf = target.reshape(-1)

    min_chunk = SUBLANE * LANE  # 1024 elements
    padded = _round_up(n, min_chunk)
    if padded != n:
        # Only genuinely ragged sizes pay this copy.  Pad x with a huge negative and t
        # with 0 so every padded element contributes exactly 0 to all four partial sums
        # (sigmoid -> 0, softplus -> 0, t -> 0): no in-kernel mask for element padding.
        xf = jnp.pad(xf, (0, padded - n), constant_values=NEG_PAD)
        tf = jnp.pad(tf, (0, padded - n))
    rows = padded // LANE
    x2 = xf.reshape(rows, LANE)
    t2 = tf.reshape(rows, LANE)

    tile_rows = _choose_tile_rows(rows)
    num_tiles = -(-rows // tile_rows)
    valid_rows_last = rows - (num_tiles - 1) * tile_rows  # rows in final (maybe ragged) tile

    kernel = functools.partial(_dice_bce_partial_kernel,
                               valid_rows_last=valid_rows_last)

    partials = pl.pallas_call(
        kernel,
        out_shape=jax.ShapeDtypeStruct((num_tiles, 4, LANE), jnp.float32),
        grid=(num_tiles,),
        in_specs=[
            pl.BlockSpec((tile_rows, LANE), lambda i: (i, 0)),
            pl.BlockSpec((tile_rows, LANE), lambda i: (i, 0)),
        ],
        out_specs=pl.BlockSpec((None, 4, LANE), lambda i: (i, 0, 0)),
        compiler_params=pltpu.CompilerParams(
            dimension_semantics=("parallel",),   # independent tiles -> megacore on v7x
            vmem_limit_bytes=VMEM_LIMIT_BYTES,
        ),
    )(x2, t2)

    # Tiny final combine (num_tiles * 4 * 128 values) + scalar math, fused under jit.
    sums = jnp.sum(partials, axis=(0, 2))  # (4,)
    sum_p, sum_t, sum_pt, sum_bce = sums[0], sums[1], sums[2], sums[3]
    dice_loss = 1.0 - (2.0 * sum_pt + smooth) / (sum_p + sum_t + smooth)
    bce_mean = sum_bce / jnp.float32(n)
    return bce_mean + dice_loss


def dice_bce_loss_ref(x, target, smooth: float = 1.0):
    """Plain-JAX reference mirroring the PyTorch forward."""
    p = jax.nn.sigmoid(x.astype(jnp.float32)).reshape(-1)
    t = target.astype(jnp.float32).reshape(-1)
    intersection = jnp.sum(p * t)
    dice_loss = 1.0 - (2.0 * intersection + smooth) / (jnp.sum(p) + jnp.sum(t) + smooth)
    bce = -(t * jnp.maximum(jnp.log(p), -100.0)
            + (1.0 - t) * jnp.maximum(jnp.log(1.0 - p), -100.0))
    return jnp.mean(bce) + dice_loss


if __name__ == "__main__":
    key = jax.random.PRNGKey(0)

    # Primary check: NCHW logits + binary targets (aligned size -> pure fast path).
    kx, kt, kx2, kt2 = jax.random.split(key, 4)
    x = jax.random.normal(kx, (2, 4, 16, 16), dtype=jnp.float32)
    target = jax.random.bernoulli(kt, 0.5, (2, 4, 16, 16)).astype(jnp.float32)
    out = jax.block_until_ready(dice_bce_loss(x, target))
    ref = jax.block_until_ready(dice_bce_loss_ref(x, target))
    assert jnp.isfinite(out), "kernel produced non-finite loss"
    assert abs(float(out) - float(ref)) < 1e-4, (float(out), float(ref))

    # Secondary check: exercises the masked ragged-last-tile path (rows=24, tile=16).
    xb = jax.random.normal(kx2, (2, 3, 16, 32), dtype=jnp.float32)
    tb = jax.random.bernoulli(kt2, 0.3, (2, 3, 16, 32)).astype(jnp.float32)
    out_b = jax.block_until_ready(dice_bce_loss(xb, tb))
    ref_b = jax.block_until_ready(dice_bce_loss_ref(xb, tb))
    assert jnp.isfinite(out_b), "kernel produced non-finite loss (ragged case)"
    assert abs(float(out_b) - float(ref_b)) < 1e-4, (float(out_b), float(ref_b))

    print("KERNEL_OK")
</pallas_src>

<mosaic_0001>
module attributes {stable_mosaic.version = 11 : i64} {
  func.func @_dice_bce_partial_kernel(%arg0: i32, %arg1: memref<8x128xf32, #tpu.memory_space<vmem>>, %arg2: memref<8x128xf32, #tpu.memory_space<vmem>>, %arg3: memref<1x4x128xf32, #tpu.memory_space<vmem>>) attributes {dimension_semantics = [#tpu.dimension_semantics<parallel>], iteration_bounds = array<i64: 2>, scalar_prefetch = 0 : i64, scratch_operands = 0 : i64, tpu.core_type = #tpu.core_type<tc>, window_params = [{transform_indices = @transform_0, window_bounds = array<i64: 8, 128>}, {transform_indices = @transform_1, window_bounds = array<i64: 8, 128>}, {transform_indices = @transform_2, window_bounds = array<i64: 1, 4, 128>}]} {
    %c0 = arith.constant 0 : index
    %c0_0 = arith.constant 0 : index
    %0 = vector.load %arg1[%c0, %c0_0] : memref<8x128xf32, #tpu.memory_space<vmem>>, vector<8x128xf32>
    %c0_1 = arith.constant 0 : index
    %c0_2 = arith.constant 0 : index
    %1 = vector.load %arg2[%c0_1, %c0_2] : memref<8x128xf32, #tpu.memory_space<vmem>>, vector<8x128xf32>
    %2 = math.absf %0 : vector<8x128xf32>
    %cst = arith.constant 0.000000e+00 : f32
    %3 = vector.broadcast %cst : f32 to vector<8x128xf32>
    %4 = arith.subf %3, %2 : vector<8x128xf32>
    %5 = math.exp %4 : vector<8x128xf32>
    %cst_3 = arith.constant 0.000000e+00 : f32
    %6 = vector.broadcast %cst_3 : f32 to vector<8x128xf32>
    %7 = arith.cmpf oge, %0, %6 : vector<8x128xf32>
    %cst_4 = arith.constant 1.000000e+00 : f32
    %8 = vector.broadcast %cst_4 : f32 to vector<8x128xf32>
    %9 = arith.select %7, %8, %5 : vector<8x128xi1>, vector<8x128xf32>
    %cst_5 = arith.constant 1.000000e+00 : f32
    %10 = vector.broadcast %cst_5 : f32 to vector<8x128xf32>
    %11 = arith.addf %10, %5 : vector<8x128xf32>
    %12 = arith.divf %9, %11 : vector<8x128xf32>
    %cst_6 = arith.constant 0.000000e+00 : f32
    %13 = vector.broadcast %cst_6 : f32 to vector<8x128xf32>
    %14 = arith.maximumf %0, %13 : vector<8x128xf32>
    %cst_7 = arith.constant 1.000000e+00 : f32
    %15 = vector.broadcast %cst_7 : f32 to vector<8x128xf32>
    %16 = arith.addf %15, %5 : vector<8x128xf32>
    %17 = math.log %16 : vector<8x128xf32>
    %18 = arith.addf %14, %17 : vector<8x128xf32>
    %19 = arith.subf %18, %0 : vector<8x128xf32>
    %cst_8 = arith.constant 1.000000e+02 : f32
    %20 = vector.broadcast %cst_8 : f32 to vector<8x128xf32>
    %21 = arith.minimumf %19, %20 : vector<8x128xf32>
    %22 = arith.mulf %1, %21 : vector<8x128xf32>
    %cst_9 = arith.constant 1.000000e+00 : f32
    %23 = vector.broadcast %cst_9 : f32 to vector<8x128xf32>
    %24 = arith.subf %23, %1 : vector<8x128xf32>
    %cst_10 = arith.constant 1.000000e+02 : f32
    %25 = vector.broadcast %cst_10 : f32 to vector<8x128xf32>
    %26 = arith.minimumf %18, %25 : vector<8x128xf32>
    %27 = arith.mulf %24, %26 : vector<8x128xf32>
    %28 = arith.addf %22, %27 : vector<8x128xf32>
    %29 = arith.mulf %12, %1 : vector<8x128xf32>
    %cst_11 = arith.constant dense<0.000000e+00> : vector<128xf32>
    %30 = vector.multi_reduction <add>, %12, %cst_11 [0] : vector<8x128xf32> to vector<128xf32>
    %31 = vector.shape_cast %30 : vector<128xf32> to vector<1x128xf32>
    %c0_12 = arith.constant 0 : index
    %c0_13 = arith.constant 0 : index
    %c0_14 = arith.constant 0 : index
    %32 = vector.load %arg3[%c0_12, %c0_13, %c0_14] : memref<1x4x128xf32, #tpu.memory_space<vmem>>, vector<1x1x128xf32>
    %33 = vector.shape_cast %32 : vector<1x1x128xf32> to vector<1x128xf32>
    %34 = vector.shape_cast %31 : vector<1x128xf32> to vector<1x1x128xf32>
    tpu.vector_store %arg3[%c0_12, %c0_13, %c0_14], %34 {strides = array<i32>} : memref<1x4x128xf32, #tpu.memory_space<vmem>>, vector<1x1x128xf32>,
    %cst_15 = arith.constant dense<0.000000e+00> : vector<128xf32>
    %35 = vector.multi_reduction <add>, %1, %cst_15 [0] : vector<8x128xf32> to vector<128xf32>
    %36 = vector.shape_cast %35 : vector<128xf32> to vector<1x128xf32>
    %c0_16 = arith.constant 0 : index
    %c1 = arith.constant 1 : index
    %c0_17 = arith.constant 0 : index
    %37 = vector.load %arg3[%c0_16, %c1, %c0_17] : memref<1x4x128xf32, #tpu.memory_space<vmem>>, vector<1x1x128xf32>
    %38 = vector.shape_cast %37 : vector<1x1x128xf32> to vector<1x128xf32>
    %39 = vector.shape_cast %36 : vector<1x128xf32> to vector<1x1x128xf32>
    tpu.vector_store %arg3[%c0_16, %c1, %c0_17], %39 {strides = array<i32>} : memref<1x4x128xf32, #tpu.memory_space<vmem>>, vector<1x1x128xf32>,
    %cst_18 = arith.constant dense<0.000000e+00> : vector<128xf32>
    %40 = vector.multi_reduction <add>, %29, %cst_18 [0] : vector<8x128xf32> to vector<128xf32>
    %41 = vector.shape_cast %40 : vector<128xf32> to vector<1x128xf32>
    %c0_19 = arith.constant 0 : index
    %c2 = arith.constant 2 : index
    %c0_20 = arith.constant 0 : index
    %42 = vector.load %arg3[%c0_19, %c2, %c0_20] : memref<1x4x128xf32, #tpu.memory_space<vmem>>, vector<1x1x128xf32>
    %43 = vector.shape_cast %42 : vector<1x1x128xf32> to vector<1x128xf32>
    %44 = vector.shape_cast %41 : vector<1x128xf32> to vector<1x1x128xf32>
    tpu.vector_store %arg3[%c0_19, %c2, %c0_20], %44 {strides = array<i32>} : memref<1x4x128xf32, #tpu.memory_space<vmem>>, vector<1x1x128xf32>,
    %cst_21 = arith.constant dense<0.000000e+00> : vector<128xf32>
    %45 = vector.multi_reduction <add>, %28, %cst_21 [0] : vector<8x128xf32> to vector<128xf32>
    %46 = vector.shape_cast %45 : vector<128xf32> to vector<1x128xf32>
    %c0_22 = arith.constant 0 : index
    %c3 = arith.constant 3 : index
    %c0_23 = arith.constant 0 : index
    %47 = vector.load %arg3[%c0_22, %c3, %c0_23] : memref<1x4x128xf32, #tpu.memory_space<vmem>>, vector<1x1x128xf32>
    %48 = vector.shape_cast %47 : vector<1x1x128xf32> to vector<1x128xf32>
    %49 = vector.shape_cast %46 : vector<1x128xf32> to vector<1x1x128xf32>
    tpu.vector_store %arg3[%c0_22, %c3, %c0_23], %49 {strides = array<i32>} : memref<1x4x128xf32, #tpu.memory_space<vmem>>, vector<1x1x128xf32>,
    return
  }
  func.func @transform_0(%arg0: i32) -> (i32, i32) {
    %c0_i32 = arith.constant 0 : i32
    %c0_i32_0 = arith.constant 0 : i32
    return %arg0, %c0_i32 : i32, i32
  }
  func.func @transform_1(%arg0: i32) -> (i32, i32) {
    %c0_i32 = arith.constant 0 : i32
    %c0_i32_0 = arith.constant 0 : i32
    return %arg0, %c0_i32 : i32, i32
  }
  func.func @transform_2(%arg0: i32) -> (i32, i32, i32) {
    %c0_i32 = arith.constant 0 : i32
    %c0_i32_0 = arith.constant 0 : i32
    %c0_i32_1 = arith.constant 0 : i32
    return %arg0, %c0_i32, %c0_i32_0 : i32, i32, i32
  }
}

</mosaic_0001>

<llo_original>
// kernel: dice_bce_loss.1
$region0: #{dice_bce_loss.1}
  #allocation0 [shape = 'u32[]', space=smem, size = 0x4, offset = 0x4, fixed_abs, tag = 'smem constant byte address 0x4 - core index']
  #allocation1 [shape = 'u32[72,128]{1,0:T(1,128)}', space=vmem, size = 0x9000, scoped, tag = 'internal scratch']
  %s0 = inlined_call_operand.vmem [shape: f32[16,128], index: 0, kind: input, shape index: {}]
  %s1 = inlined_call_operand.vmem [shape: f32[16,128], index: 1, kind: input, shape index: {}]
  %s2 = inlined_call_operand.vmem [shape: f32[2,4,128], index: 2, kind: output, shape index: {}]
  %s3 = sld [smem:[#allocation0]]
  $region41: #{dice_bce_loss.1} parent=0
    _
  %s5 = ssub.s32 1, %s3
  %s6 = scalar_select 0, %s5, %s3
  loop: start=0, step=1, limit=4
  $region2: #{dice_bce_loss.1} parent=0 // loop_pre_header
    _
  $region3: #{dice_bce_loss.1} parent=0 // loop_header
    %s8 = sphi 0, %s12
    %p9 = scmp.ge.s32.totalorder %s8, 4
    %s18 = sphi 0, %s20
    %s21 = sphi 0, %s18
    %s22 = sphi 0, %s21
    %s38 = sphi 0, %s22
    %s44 = sphi 0, %s46
    %s47 = sphi 0, %s44
    %s48 = sphi 0, %s47
    %s64 = sphi 0, %s48
    %s70 = sphi 0, %s72
    %s73 = sphi 0, %s70
    %s74 = sphi 0, %s73
    %s90 = sphi 0, %s74
  $region4: #{dice_bce_loss.1} parent=0 // loop_header_branch
    %11 = sbr.rel (%p9) target = $region8
  $region5: #{dice_bce_loss.1} parent=0 // loop_body
    %s13 = ssub.s32 %s8, 1
    %s14 = ssub.s32 %s8, 2
    %s15 = sadd.s32 %s8, 1
    %s16 = ssub.s32 %s8, %s15
    %p17 = scmp.eq.s32.totalorder %s16, 0
    %s19 = sadd.s32 %s18, 1
    %s20 = scalar_select %p17, %s18, %s19
    %p23 = pneg %p17
    %p24 = scmp.eq.s32.totalorder %s8, 1
    %p25 = por %p23, %p24
    %p26 = scmp.ne.s32.totalorder %s18, %s21
    %p27 = scmp.eq.s32.totalorder %s8, 0
    %p28 = por %p26, %p27
    %p29 = scmp.ne.s32.totalorder %s18, %s21
    %p30 = scmp.eq.s32.totalorder %s13, 1
    %p31 = por %p29, %p30
    %p32 = scmp.ne.s32.totalorder %s21, %s22
    %p33 = scmp.eq.s32.totalorder %s13, 0
    %p34 = por %p32, %p33
    %p35 = scmp.ne.s32.totalorder %s21, %s22
    %p36 = scmp.eq.s32.totalorder %s14, 1
    %p37 = por %p35, %p36
    %p39 = scmp.ne.s32.totalorder %s22, %s38
    %p40 = scmp.eq.s32.totalorder %s14, 0
    %p41 = por %p39, %p40
    %s42 = ssub.s32 %s8, %s15
    %p43 = scmp.eq.s32.totalorder %s42, 0
    %s45 = sadd.s32 %s44, 1
    %s46 = scalar_select %p43, %s44, %s45
    %p49 = pneg %p43
    %p50 = scmp.eq.s32.totalorder %s8, 1
    %p51 = por %p49, %p50
    %p52 = scmp.ne.s32.totalorder %s44, %s47
    %p53 = scmp.eq.s32.totalorder %s8, 0
    %p54 = por %p52, %p53
    %p55 = scmp.ne.s32.totalorder %s44, %s47
    %p56 = scmp.eq.s32.totalorder %s13, 1
    %p57 = por %p55, %p56
    %p58 = scmp.ne.s32.totalorder %s47, %s48
    %p59 = scmp.eq.s32.totalorder %s13, 0
    %p60 = por %p58, %p59
    %p61 = scmp.ne.s32.totalorder %s47, %s48
    %p62 = scmp.eq.s32.totalorder %s14, 1
    %p63 = por %p61, %p62
    %p65 = scmp.ne.s32.totalorder %s48, %s64
    %p66 = scmp.eq.s32.totalorder %s14, 0
    %p67 = por %p65, %p66
    %s68 = ssub.s32 %s8, %s15
    %p69 = scmp.eq.s32.totalorder %s68, 0
    %s71 = sadd.s32 %s70, 1
    %s72 = scalar_select %p69, %s70, %s71
    %p75 = pneg %p69
    %p76 = scmp.eq.s32.totalorder %s8, 1
    %p77 = por %p75, %p76
    %p78 = scmp.ne.s32.totalorder %s70, %s73
    %p79 = scmp.eq.s32.totalorder %s8, 0
    %p80 = por %p78, %p79
    %p81 = scmp.ne.s32.totalorder %s70, %s73
    %p82 = scmp.eq.s32.totalorder %s13, 1
    %p83 = por %p81, %p82
    %p84 = scmp.ne.s32.totalorder %s73, %s74
    %p85 = scmp.eq.s32.totalorder %s13, 0
    %p86 = por %p84, %p85
    %p87 = scmp.ne.s32.totalorder %s73, %s74
    %p88 = scmp.eq.s32.totalorder %s14, 1
    %p89 = por %p87, %p88
    %p91 = scmp.ne.s32.totalorder %s74, %s90
    %p92 = scmp.eq.s32.totalorder %s14, 0
    %p93 = por %p91, %p92
    %p94 = scmp.le.s32.totalorder 1, %s8
    %p95 = scmp.lt.s32.totalorder %s8, 3
    %p96 = pnand %p94, %p95
    %p97 = pneg %p96
    // Predicated region
    $region9: #{dice_bce_loss.1} parent=5 // pred_check
      _
    $region10: #{dice_bce_loss.1} parent=5 // pred_check_branch
      %99 = sbr.rel (%p96) target = $region12
    $region11: #{dice_bce_loss.1} parent=5 // pred_region
      %s100 = ssub.s32 %s8, 1
    $region12: #{dice_bce_loss.1} parent=5 // pred_fallthru
      _
    %p101 = scmp.lt.s32.totalorder %s8, 2
    // Predicated region
    $region13: #{dice_bce_loss.1} parent=5 // pred_check
      %p102 = pneg %p101
    $region14: #{dice_bce_loss.1} parent=5 // pred_check_branch
      %104 = sbr.rel (%p102) target = $region16
    $region15: #{dice_bce_loss.1} parent=5 // pred_region
      // Predicated region
      $region17: #{dice_bce_loss.1} parent=15 // pred_check
        %p105 = pneg %p28
      $region18: #{dice_bce_loss.1} parent=15 // pred_check_branch
        %107 = sbr.rel (%p105) target = $region20
      $region19: #{dice_bce_loss.1} parent=15 // pred_region
        %p108 = scmp.lt.s32.totalorder %s8, 1
        %s109 = scalar_select %p108, %s8, 1
        %s110 = smul.addr %s109, 8
        %s111 = scalar_lea.vmem %s0, %s110
      $region20: #{dice_bce_loss.1} parent=15 // pred_fallthru
        _
      // Predicated region
      $region21: #{dice_bce_loss.1} parent=15 // pred_check
        %p112 = pneg %p54
      $region22: #{dice_bce_loss.1} parent=15 // pred_check_branch
        %114 = sbr.rel (%p112) target = $region24
      $region23: #{dice_bce_loss.1} parent=15 // pred_region
        %p115 = scmp.lt.s32.totalorder %s8, 1
        %s116 = scalar_select %p115, %s8, 1
        %s117 = smul.addr %s116, 8
        %s118 = scalar_lea.vmem %s1, %s117
      $region24: #{dice_bce_loss.1} parent=15 // pred_fallthru
        _
    $region16: #{dice_bce_loss.1} parent=5 // pred_fallthru
      _
    %p119 = scmp.le.s32.totalorder 1, %s8
    %p120 = scmp.lt.s32.totalorder %s8, 3
    %p121 = pnand %p119, %p120
    %p122 = pneg %p121
    // Predicated region
    $region25: #{dice_bce_loss.1} parent=5 // pred_check
      _
    $region26: #{dice_bce_loss.1} parent=5 // pred_check_branch
      %124 = sbr.rel (%p121) target = $region28
    $region27: #{dice_bce_loss.1} parent=5 // pred_region
      %s125 = ssub.s32 %s8, 1
      %p126 = scmp.lt.s32.totalorder %s13, 1
      %s127 = scalar_select %p126, %s13, 1
      %s128 = smul.addr %s127, 8
      %s129 = scalar_lea.vmem %s0, %s128
      %p130 = pneg %p34
      %p131 = pneg %p31
      %p132 = scmp.lt.s32.totalorder %s13, 1
      %s133 = scalar_select %p132, %s13, 1
      %s134 = smul.addr %s133, 8
      %s135 = scalar_lea.vmem %s1, %s134
      %p136 = pneg %p60
      %p137 = pneg %p57
      %p138 = pneg %p86
      %p139 = pneg %p83
      %p140 = scmp.lt.s32.totalorder %s13, 1
      %s141 = scalar_select %p140, %s13, 1
      %s142 = smul.addr %s141, 4
      %s143 = scalar_lea.vmem %s2, %s142
      %p144 = scmp.lt.s32.totalorder %s13, 1
      %s145 = scalar_select %p144, %s13, 1
      %s146 = smul.addr %s145, 8
      %s147 = scalar_lea.vmem %s0, %s146
      %p148 = scmp.lt.s32.totalorder %s13, 1
      %s149 = scalar_select %p148, %s13, 1
      %s150 = smul.addr %s149, 8
      %s151 = scalar_lea.vmem %s1, %s150
      %p152 = scmp.lt.s32.totalorder %s13, 1
      %s153 = scalar_select %p152, %s13, 1
      %s154 = smul.addr %s153, 4
      %s155 = scalar_lea.vmem %s2, %s154
      %v156 = vld [vmem:[%s147] sm:$0xff]
      %v157 = vld [vmem:[%s151] sm:$0xff]
      %v158 = vand.u32 2147483647, %v156
      %v159 = vsub.f32 0.0, %v158
      %v160 = vmul.f32 %v159, 1.442695
      %v161 = vpow.pop %v160
      %vm162 = vcmp.ge.f32.partialorder %v156, 0.0
      %v163 = vsel %vm162, 1.0, %v161
      %v164 = vadd.f32 %v161, 1.0
      %v165 = vrcp.pop %v164
      %v166 = vmul.f32 %v164, %v165
      %v167 = vsub.f32 1.0, %v166
      %v168 = vmul.f32 %v165, %v167
      %v169 = vadd.f32 %v165, %v168
      %vm170 = vweird.f32 %v164
      %vm171 = vweird.f32 %v165
      %vm172 = vmor %vm170, %vm171
      %v173 = vsel %vm172, %v165, %v169
      %v174 = vand.u32 2147483647, %v164
      %vm175 = vcmp.eq.f32.partialorder %v174, 8.507059e+37
      %v176 = vand.u32 %v164, 2147483648
      %v177 = vor.u32 1.1754944e-38, %v176
      %v178 = vsel %vm175, %v177, %v173
      %v179 = vmul.f32 %v163, %v178
      %v180 = vmax.f32 %v156, 0.0
      %v181 = vlog2.pop %v164
      %v182 = vmul.f32 %v181, 0.6931472
      %v183 = vadd.f32 %v180, %v182
      %v184 = vsub.f32 %v183, %v156
      %v185 = vmin.f32 %v184, 100.0
      %v186 = vmul.f32 %v157, %v185
      %v187 = vsub.f32 1.0, %v157
      %v188 = vmin.f32 %v183, 100.0
      %v189 = vmul.f32 %v187, %v188
      %v190 = vadd.f32 %v186, %v189
      %v191 = vmul.f32 %v179, %v157
      %v192 = vrot.slane %v179, 4
      %v193 = vadd.f32 %v179, %v192
      %v194 = vrot.slane %v193, 2
      %v195 = vadd.f32 %v193, %v194
      %v196 = vrot.slane %v195, 1
      %v197 = vadd.f32 %v195, %v196
      %198 = vst [vmem:[%s155] sm:$0x1] %v197
      %v199 = vrot.slane %v157, 4
      %v200 = vadd.f32 %v157, %v199
      %v201 = vrot.slane %v200, 2
      %v202 = vadd.f32 %v200, %v201
      %v203 = vrot.slane %v202, 1
      %v204 = vadd.f32 %v202, %v203
      %205 = vst [vmem:[%s155 + $0x1] sm:$0x1] %v204
      %v206 = vrot.slane %v191, 4
      %v207 = vadd.f32 %v191, %v206
      %v208 = vrot.slane %v207, 2
      %v209 = vadd.f32 %v207, %v208
      %v210 = vrot.slane %v209, 1
      %v211 = vadd.f32 %v209, %v210
      %212 = vst [vmem:[%s155 + $0x2] sm:$0x1] %v211
      %v213 = vrot.slane %v190, 4
      %v214 = vadd.f32 %v190, %v213
      %v215 = vrot.slane %v214, 2
      %v216 = vadd.f32 %v214, %v215
      %v217 = vrot.slane %v216, 1
      %v218 = vadd.f32 %v216, %v217
      %219 = vst [vmem:[%s155 + $0x3] sm:$0x1] %v218
      %p220 = scmp.lt.s32.totalorder %s13, 1
      %s221 = scalar_select %p220, %s13, 1
      %s222 = smul.addr %s221, 4
      %s223 = scalar_lea.vmem %s2, %s222
      // Predicated region
      $region29: #{dice_bce_loss.1} parent=27 // pred_check
        %p224 = pneg %p83
      $region30: #{dice_bce_loss.1} parent=27 // pred_check_branch
        %226 = sbr.rel (%p224) target = $region32
      $region31: #{dice_bce_loss.1} parent=27 // pred_region
        _
      $region32: #{dice_bce_loss.1} parent=27 // pred_fallthru
        _
    $region28: #{dice_bce_loss.1} parent=5 // pred_fallthru
      _
    %p227 = scmp.le.s32.totalorder 2, %s8
    // Predicated region
    $region33: #{dice_bce_loss.1} parent=5 // pred_check
      %p228 = pneg %p227
    $region34: #{dice_bce_loss.1} parent=5 // pred_check_branch
      %230 = sbr.rel (%p228) target = $region36
    $region35: #{dice_bce_loss.1} parent=5 // pred_region
      %s231 = ssub.s32 %s8, 2
      // Predicated region
      $region37: #{dice_bce_loss.1} parent=35 // pred_check
        %p232 = pneg %p89
      $region38: #{dice_bce_loss.1} parent=35 // pred_check_branch
        %234 = sbr.rel (%p232) target = $region40
      $region39: #{dice_bce_loss.1} parent=35 // pred_region
        %p235 = scmp.lt.s32.totalorder %s14, 1
        %s236 = scalar_select %p235, %s14, 1
        %s237 = smul.addr %s236, 4
        %s238 = scalar_lea.vmem %s2, %s237
      $region40: #{dice_bce_loss.1} parent=35 // pred_fallthru
        _
    $region36: #{dice_bce_loss.1} parent=5 // pred_fallthru
      _
  $region6: #{dice_bce_loss.1} parent=0 // loop_footer
    %s12 = sadd.s32 1, %s8
  $region7: #{dice_bce_loss.1} parent=0 // loop_footer_branch
    %7 = sbr.rel target = $region3
  $region8: #{dice_bce_loss.1} parent=0 // loop_exit
    _

</llo_original>
